<compile_context>
chip_gen: v7x
topology: tpu7x:2x2x1
jax: 0.10.0
libtpu: 0.0.40
codegen_flags: <defaults>
</compile_context>

<pallas_src>
import math

import jax
import jax.numpy as jnp
from jax.experimental import pallas as pl
from jax.experimental.pallas import tpu as pltpu


def head_kernel(x_ref, w1_ref, b1_ref, w2_ref, b2_ref, o_ref):
    # Cast the streamed x tile to bf16 in-kernel (VPU); MXU dot accumulates f32.
    x = x_ref[...].astype(jnp.bfloat16)
    # fc1 (block-diagonal): (tb, p*in_dim) @ (p*in_dim, p*32) -> (tb, p*32) f32.
    h = jnp.dot(x, w1_ref[...], preferred_element_type=jnp.float32)
    # bias + ReLU on the f32 accumulator (VPU); drop1 is identity in eval mode.
    h = jnp.maximum(h + b1_ref[...], 0.0)
    # Narrow h before fc2: halves the largest in-kernel temp / any spill traffic.
    h = h.astype(jnp.bfloat16)
    # fc2 (block-diagonal): (tb, p*32) @ (p*32, p) -> (tb, p) f32. No transpose.
    out = jnp.dot(h, w2_ref[...], preferred_element_type=jnp.float32)
    o_ref[...] = (out + b2_ref[0, 0]).astype(o_ref.dtype)


def head_forward(x, w1, b1, w2, b2, *, block_rows=32768):
    """relu(x @ w1 + b1) @ w2.T + b2 with eval-mode dropout.

    Shapes: x (B, in_dim); w1 (in_dim, 32) == fc1.weight.T; b1 (32,);
            w2 (1, 32)  == fc2.weight;     b2 (1,).
    Returns (B, 1) in x.dtype.
    """
    B, in_dim = x.shape
    hidden = w1.shape[-1]
    out_dtype = x.dtype

    # Row-packing factor: pack p rows per lane-dense packed row (p*in_dim ~ 128+).
    if in_dim >= 128:
        p = 1
    else:
        p = max(1, 128 // math.gcd(128, in_dim))
        p = min(p, 16)  # cap the block-diag MXU waste factor

    # Pad B only up to a multiple of 8*p (<= 8*p-1 zero rows) so every block's
    # sublane dim stays 8-aligned; tile-boundary raggedness is handled by Pallas
    # masked boundary blocks, NOT by padding to a multiple of the tile.
    align = 8 * p
    pad = (-B) % align
    if pad:
        x = jnp.concatenate([x, jnp.zeros((pad, in_dim), x.dtype)], axis=0)
    b_padded = B + pad
    bp = b_padded // p  # number of packed rows

    # Packed x view (free for contiguous row-major x) + tiny resident params.
    xp = x.reshape(bp, p * in_dim)
    eye = jnp.eye(p, dtype=jnp.float32)
    w1f = jnp.asarray(w1, jnp.float32)                       # (in_dim, hidden)
    w2f = jnp.asarray(w2, jnp.float32).reshape(hidden, 1)    # fc2.weight.T column
    w1bd = jnp.kron(eye, w1f).astype(jnp.bfloat16)           # (p*in_dim, p*hidden)
    w2bd = jnp.kron(eye, w2f).astype(jnp.bfloat16)           # (p*hidden, p)
    b1t = jnp.tile(jnp.asarray(b1, jnp.float32), p).reshape(1, p * hidden)
    b2v = jnp.asarray(b2, jnp.float32).reshape(1, 1)

    # Batch tile in packed rows: big enough to amortize per-step overhead
    # (~2 MiB of x per step at the default), 8-aligned, clamped to the array.
    tb = (max(block_rows // p, 8) // 8) * 8
    if tb >= bp:
        tb = bp  # single tile; block equals the full array dims
    n_tiles = pl.cdiv(bp, tb)

    out = pl.pallas_call(
        head_kernel,
        out_shape=jax.ShapeDtypeStruct((bp, p), out_dtype),
        grid=(n_tiles,),
        in_specs=[
            pl.BlockSpec((tb, p * in_dim), lambda i: (i, 0)),        # streamed x
            pl.BlockSpec((p * in_dim, p * hidden), lambda i: (0, 0)),  # fc1 W (resident)
            pl.BlockSpec((1, p * hidden), lambda i: (0, 0)),           # fc1 b (resident)
            pl.BlockSpec((p * hidden, p), lambda i: (0, 0)),           # fc2 W (resident)
            pl.BlockSpec(memory_space=pltpu.MemorySpace.SMEM),         # fc2 b scalar
        ],
        out_specs=pl.BlockSpec((tb, p), lambda i: (i, 0)),
        compiler_params=pltpu.CompilerParams(
            dimension_semantics=("parallel",),
            vmem_limit_bytes=32 * 1024 * 1024,  # covers ~13 MiB peak; raises v5e's 16 MiB default
        ),
    )(xp, w1bd, b1t, w2bd, b2v)

    # (bp, p) -> (b_padded, 1), dropping the small padded tail.
    return out.reshape(b_padded, 1)[:B]


if __name__ == "__main__":
    B = 300          # not a multiple of 8*p -> exercises the small tail pad
    IN_DIM = 16
    HIDDEN = 32

    key = jax.random.PRNGKey(0)
    k_x, k_w1, k_b1, k_w2, k_b2 = jax.random.split(key, 5)

    # Deterministic parameter init (uniform, like PyTorch's default Linear init).
    bound1 = 1.0 / (IN_DIM ** 0.5)
    w1 = jax.random.uniform(k_w1, (IN_DIM, HIDDEN), jnp.float32, -bound1, bound1)  # fc1.weight.T
    b1 = jax.random.uniform(k_b1, (HIDDEN,), jnp.float32, -bound1, bound1)          # fc1.bias
    bound2 = 1.0 / (HIDDEN ** 0.5)
    w2 = jax.random.uniform(k_w2, (1, HIDDEN), jnp.float32, -bound2, bound2)         # fc2.weight
    b2 = jax.random.uniform(k_b2, (1,), jnp.float32, -bound2, bound2)                # fc2.bias

    x = jax.random.normal(k_x, (B, IN_DIM), jnp.float32)

    out = head_forward(x, w1, b1, w2, b2)
    out = jax.block_until_ready(out)

    # Pure-JAX reference applying the same bf16 roundings the kernel uses
    # (x, w1, h, w2 rounded to bf16; accumulation in f32).
    xb = x.astype(jnp.bfloat16).astype(jnp.float32)
    w1b = w1.astype(jnp.bfloat16).astype(jnp.float32)
    w2b = w2.astype(jnp.bfloat16).astype(jnp.float32)
    h_ref = jnp.maximum(xb @ w1b + b1[None, :], 0.0)
    h_ref = h_ref.astype(jnp.bfloat16).astype(jnp.float32)
    ref = h_ref @ w2b.T + b2[None, :]

    assert out.shape == (B, 1)
    max_err = float(jnp.max(jnp.abs(out - ref)))
    assert jnp.allclose(out, ref, atol=1e-2, rtol=1e-2), max_err

    print("KERNEL_OK")
</pallas_src>

<mosaic_0001>
module attributes {stable_mosaic.version = 11 : i64} {
  func.func @head_kernel(%arg0: i32, %arg1: memref<40x128xf32, #tpu.memory_space<vmem>>, %arg2: memref<128x256xbf16, #tpu.memory_space<vmem>>, %arg3: memref<1x256xf32, #tpu.memory_space<vmem>>, %arg4: memref<256x8xbf16, #tpu.memory_space<vmem>>, %arg5: memref<1x1xf32, #tpu.memory_space<smem>>, %arg6: memref<40x8xf32, #tpu.memory_space<vmem>>) attributes {dimension_semantics = [#tpu.dimension_semantics<parallel>], iteration_bounds = array<i64: 1>, scalar_prefetch = 0 : i64, scratch_operands = 0 : i64, tpu.core_type = #tpu.core_type<tc>, window_params = [{transform_indices = @transform_0, window_bounds = array<i64: 40, 128>}, {pipeline_mode = #tpu.pipeline_mode<synchronous>, transform_indices = @transform_1, window_bounds = array<i64: 128, 256>}, {pipeline_mode = #tpu.pipeline_mode<synchronous>, transform_indices = @transform_2, window_bounds = array<i64: 1, 256>}, {pipeline_mode = #tpu.pipeline_mode<synchronous>, transform_indices = @transform_3, window_bounds = array<i64: 256, 8>}, {transform_indices = @transform_4, window_bounds = array<i64: 1, 1>}, {transform_indices = @transform_5, window_bounds = array<i64: 40, 8>}]} {
    %c0 = arith.constant 0 : index
    %c0_0 = arith.constant 0 : index
    %0 = vector.load %arg1[%c0, %c0_0] : memref<40x128xf32, #tpu.memory_space<vmem>>, vector<40x128xf32>
    %1 = arith.truncf %0 : vector<40x128xf32> to vector<40x128xbf16>
    %c0_1 = arith.constant 0 : index
    %c0_2 = arith.constant 0 : index
    %2 = vector.load %arg2[%c0_1, %c0_2] : memref<128x256xbf16, #tpu.memory_space<vmem>>, vector<128x256xbf16>
    %cst = arith.constant dense<0.000000e+00> : vector<40x256xf32>
    %3 = tpu.matmul %1, %2, %cst {dimension_numbers = #tpu.dot_dimension_numbers<[1], [0], [0], [1], [0, 0, 1, 1], [], []>} : vector<40x128xbf16>, vector<128x256xbf16>, vector<40x256xf32> -> vector<40x256xf32>
    %c0_3 = arith.constant 0 : index
    %c0_4 = arith.constant 0 : index
    %4 = vector.load %arg3[%c0_3, %c0_4] : memref<1x256xf32, #tpu.memory_space<vmem>>, vector<1x256xf32>
    %5 = vector.broadcast %4 : vector<1x256xf32> to vector<40x256xf32>
    %6 = arith.addf %3, %5 : vector<40x256xf32>
    %cst_5 = arith.constant 0.000000e+00 : f32
    %7 = vector.broadcast %cst_5 : f32 to vector<40x256xf32>
    %8 = arith.maximumf %6, %7 : vector<40x256xf32>
    %9 = arith.truncf %8 : vector<40x256xf32> to vector<40x256xbf16>
    %c0_6 = arith.constant 0 : index
    %c0_7 = arith.constant 0 : index
    %10 = vector.load %arg4[%c0_6, %c0_7] : memref<256x8xbf16, #tpu.memory_space<vmem>>, vector<256x8xbf16>
    %cst_8 = arith.constant dense<0.000000e+00> : vector<40x8xf32>
    %11 = tpu.matmul %9, %10, %cst_8 {dimension_numbers = #tpu.dot_dimension_numbers<[1], [0], [0], [1], [0, 0, 1, 1], [], []>} : vector<40x256xbf16>, vector<256x8xbf16>, vector<40x8xf32> -> vector<40x8xf32>
    %c0_9 = arith.constant 0 : index
    %c0_10 = arith.constant 0 : index
    %12 = memref.load %arg5[%c0_9, %c0_10] : memref<1x1xf32, #tpu.memory_space<smem>>
    %13 = vector.broadcast %12 : f32 to vector<40x8xf32>
    %14 = arith.addf %11, %13 : vector<40x8xf32>
    %c0_11 = arith.constant 0 : index
    %c0_12 = arith.constant 0 : index
    %15 = vector.load %arg6[%c0_11, %c0_12] : memref<40x8xf32, #tpu.memory_space<vmem>>, vector<40x8xf32>
    tpu.vector_store %arg6[%c0_11, %c0_12], %14 {strides = array<i32>} : memref<40x8xf32, #tpu.memory_space<vmem>>, vector<40x8xf32>,
    return
  }
  func.func @transform_0(%arg0: i32) -> (i32, i32) {
    %c0_i32 = arith.constant 0 : i32
    %c0_i32_0 = arith.constant 0 : i32
    return %arg0, %c0_i32 : i32, i32
  }
  func.func @transform_1(%arg0: i32) -> (i32, i32) {
    %c0_i32 = arith.constant 0 : i32
    %c0_i32_0 = arith.constant 0 : i32
    %c0_i32_1 = arith.constant 0 : i32
    return %c0_i32, %c0_i32_0 : i32, i32
  }
  func.func @transform_2(%arg0: i32) -> (i32, i32) {
    %c0_i32 = arith.constant 0 : i32
    %c0_i32_0 = arith.constant 0 : i32
    %c0_i32_1 = arith.constant 0 : i32
    return %c0_i32, %c0_i32_0 : i32, i32
  }
  func.func @transform_3(%arg0: i32) -> (i32, i32) {
    %c0_i32 = arith.constant 0 : i32
    %c0_i32_0 = arith.constant 0 : i32
    %c0_i32_1 = arith.constant 0 : i32
    return %c0_i32, %c0_i32_0 : i32, i32
  }
  func.func @transform_4(%arg0: i32) -> (i32, i32) {
    %c0_i32 = arith.constant 0 : i32
    %c0_i32_0 = arith.constant 0 : i32
    %c0_i32_1 = arith.constant 0 : i32
    return %c0_i32, %c0_i32_0 : i32, i32
  }
  func.func @transform_5(%arg0: i32) -> (i32, i32) {
    %c0_i32 = arith.constant 0 : i32
    %c0_i32_0 = arith.constant 0 : i32
    return %arg0, %c0_i32 : i32, i32
  }
}

</mosaic_0001>

<llo_original>
// kernel: tpu_custom_call.1
$region0: #{tpu_custom_call.1}
  #allocation0 [shape = 'u32[]', space=smem, size = 0x4, offset = 0x4, fixed_abs, tag = 'smem constant byte address 0x4 - core index']
  #allocation1 [shape = 'u32[144,128]{1,0:T(1,128)}', space=vmem, size = 0x12000, scoped, tag = 'internal scratch']
  #allocation2 [shape = 'f32[1,1]{1,0:T(1,128)S(6)}', space=smem, size = 0x200, scoped, tag = 'scoped memory for tpu_custom_call.1']
  %s0 = inlined_call_operand.hbm [shape: f32[40,128], index: 0, kind: input, shape index: {}]
  %s1 = inlined_call_operand.vmem [shape: bf16[128,256], index: 1, kind: input, shape index: {}]
  %s2 = inlined_call_operand.vmem [shape: f32[1,256], index: 2, kind: input, shape index: {}]
  %s3 = inlined_call_operand.vmem [shape: bf16[256,8], index: 3, kind: input, shape index: {}]
  %s4 = inlined_call_operand.<no memory space> [shape: f32[1,1], index: 4, kind: input, shape index: {}]
  %s5 = inlined_call_operand.vmem [shape: f32[40,8], index: 5, kind: output, shape index: {}]
  %s6 = sld [smem:[#allocation0]]
  $region34: #{tpu_custom_call.1} parent=0
    _
  %s8 = ssub.s32 1, %s6
  %s9 = scalar_select 0, %s8, %s6
  %10 = sst [smem:[#allocation2]] %s4
  $region1: #{tpu_custom_call.1} parent=0
    #allocation3 [shape = 'u8[20480]{0}', space=vmem, size = 0x5000, scoped, tag = 'input window, operand 0, single buffered']
    #allocation4 [shape = 's32[1]{0}', space=sflag, size = 0x4, scoped, tag = 'scoped memory for tpu_custom_call.1']
    %11 = vsyncpa [#allocation4], 0
    // Predicated region
    $region2: #{tpu_custom_call.1} parent=1 // pred_check
      _
    $region3: #{tpu_custom_call.1} parent=1 // pred_check_branch
      %13 = sbr.rel (0) target = $region5
    $region4: #{tpu_custom_call.1} parent=1 // pred_region
      %s15 = ssub.s32 640, 640
      %16 = vsyncadd [#allocation4], %s15
      %s17 = sshll.u32 [#allocation3], 4
      %s18 = int_to_ptr.vmem [resolvable:$true] %s17
      %23 = dma.hbm_to_vmem [thread:$0]  %s0, 640, %s18, [#allocation4], 128, 128, 8
    $region5: #{tpu_custom_call.1} parent=1 // pred_fallthru
      _
    // Predicated region
    $region6: #{tpu_custom_call.1} parent=1 // pred_check
      _
    $region7: #{tpu_custom_call.1} parent=1 // pred_check_branch
      %25 = sbr.rel (0) target = $region9
    $region8: #{tpu_custom_call.1} parent=1 // pred_region
      _
    $region9: #{tpu_custom_call.1} parent=1 // pred_fallthru
      _
    // Predicated region
    $region10: #{tpu_custom_call.1} parent=1 // pred_check
      _
    $region11: #{tpu_custom_call.1} parent=1 // pred_check_branch
      %27 = sbr.rel (0) target = $region13
    $region12: #{tpu_custom_call.1} parent=1 // pred_region
      _
    $region13: #{tpu_custom_call.1} parent=1 // pred_fallthru
      _
    // Predicated region
    $region14: #{tpu_custom_call.1} parent=1 // pred_check
      _
    $region15: #{tpu_custom_call.1} parent=1 // pred_check_branch
      %29 = sbr.rel (0) target = $region17
    $region16: #{tpu_custom_call.1} parent=1 // pred_region
      _
    $region17: #{tpu_custom_call.1} parent=1 // pred_fallthru
      _
    // Predicated region
    $region18: #{tpu_custom_call.1} parent=1 // pred_check
      _
    $region19: #{tpu_custom_call.1} parent=1 // pred_check_branch
      %31 = sbr.rel (0) target = $region21
    $region20: #{tpu_custom_call.1} parent=1 // pred_region
      _
    $region21: #{tpu_custom_call.1} parent=1 // pred_fallthru
      _
    // Predicated region
    $region22: #{tpu_custom_call.1} parent=1 // pred_check
      _
    $region23: #{tpu_custom_call.1} parent=1 // pred_check_branch
      %33 = sbr.rel (0) target = $region25
    $region24: #{tpu_custom_call.1} parent=1 // pred_region
      %34 = dma.done [#allocation4], 640
    $region25: #{tpu_custom_call.1} parent=1 // pred_fallthru
      _
    %v36 = vld [vmem:[#allocation3] sm:$0xff]
    %v37 = vld [vmem:[#allocation3 + $0x8] sm:$0xff]
    %v38 = vld [vmem:[#allocation3 + $0x10] sm:$0xff]
    %v39 = vld [vmem:[#allocation3 + $0x18] sm:$0xff]
    %v40 = vld [vmem:[#allocation3 + $0x20] sm:$0xff]
    %v41 = vpack.c.bf16 %v37, %v36
    %v42 = vpack.c.bf16 %v39, %v38
    %v43 = vpack.c.bf16 %v40, %v40
    %v44 = vld [vmem:[%s1] sm:$0xff]
    %v45 = vld [vmem:[%s1 + $0x8] sm:$0xff]
    %v46 = vld [vmem:[%s1 + $0x10] sm:$0xff]
    %v47 = vld [vmem:[%s1 + $0x18] sm:$0xff]
    %v48 = vld [vmem:[%s1 + $0x20] sm:$0xff]
    %v49 = vld [vmem:[%s1 + $0x28] sm:$0xff]
    %v50 = vld [vmem:[%s1 + $0x30] sm:$0xff]
    %v51 = vld [vmem:[%s1 + $0x38] sm:$0xff]
    %v52 = vld [vmem:[%s1 + $0x40] sm:$0xff]
    %v53 = vld [vmem:[%s1 + $0x48] sm:$0xff]
    %v54 = vld [vmem:[%s1 + $0x50] sm:$0xff]
    %v55 = vld [vmem:[%s1 + $0x58] sm:$0xff]
    %v56 = vld [vmem:[%s1 + $0x60] sm:$0xff]
    %v57 = vld [vmem:[%s1 + $0x68] sm:$0xff]
    %v58 = vld [vmem:[%s1 + $0x70] sm:$0xff]
    %v59 = vld [vmem:[%s1 + $0x78] sm:$0xff]
    %v60 = vld [vmem:[%s2] sm:$0x3]
    %v62 = vlaneseq
    %v63 = vshrl.u32 %v62, 7
    %v64 = vsub.s32 0, %v63
    %v65 = vrot.slane %v60, %v64
    %v66 = vlaneseq
    %v67 = vshrl.u32 %v66, 7
    %v68 = vsub.s32 1, %v67
    %v69 = vrot.slane %v60, %v68
    %v88 = vunpack.c.l.b16 %v44
    %v89 = vunpack.c.h.b16 %v44
    %v90 = vunpack.c.l.b16 %v45
    %v91 = vunpack.c.h.b16 %v45
    %v92 = vunpack.c.l.b16 %v46
    %v93 = vunpack.c.h.b16 %v46
    %v94 = vunpack.c.l.b16 %v47
    %v95 = vunpack.c.h.b16 %v47
    %v96 = vunpack.c.l.b16 %v48
    %v97 = vunpack.c.h.b16 %v48
    %v98 = vunpack.c.l.b16 %v49
    %v99 = vunpack.c.h.b16 %v49
    %v100 = vunpack.c.l.b16 %v50
    %v101 = vunpack.c.h.b16 %v50
    %v102 = vunpack.c.l.b16 %v51
    %v103 = vunpack.c.h.b16 %v51
    %v104 = vunpack.c.l.b16 %v52
    %v105 = vunpack.c.h.b16 %v52
    %v106 = vunpack.c.l.b16 %v53
    %v107 = vunpack.c.h.b16 %v53
    %v108 = vunpack.c.l.b16 %v54
    %v109 = vunpack.c.h.b16 %v54
    %v110 = vunpack.c.l.b16 %v55
    %v111 = vunpack.c.h.b16 %v55
    %v112 = vunpack.c.l.b16 %v56
    %v113 = vunpack.c.h.b16 %v56
    %v114 = vunpack.c.l.b16 %v57
    %v115 = vunpack.c.h.b16 %v57
    %v116 = vunpack.c.l.b16 %v58
    %v117 = vunpack.c.h.b16 %v58
    %v118 = vunpack.c.l.b16 %v59
    %v119 = vunpack.c.h.b16 %v59
    %v120 = vpack.c.b16 %v90, %v88
    %v121 = vpack.c.b16 %v91, %v89
    %v122 = vpack.c.b16 %v94, %v92
    %v123 = vpack.c.b16 %v95, %v93
    %v124 = vpack.c.b16 %v98, %v96
    %v125 = vpack.c.b16 %v99, %v97
    %v126 = vpack.c.b16 %v102, %v100
    %v127 = vpack.c.b16 %v103, %v101
    %v128 = vpack.c.b16 %v106, %v104
    %v129 = vpack.c.b16 %v107, %v105
    %v130 = vpack.c.b16 %v110, %v108
    %v131 = vpack.c.b16 %v111, %v109
    %v132 = vpack.c.b16 %v114, %v112
    %v133 = vpack.c.b16 %v115, %v113
    %v134 = vpack.c.b16 %v118, %v116
    %v135 = vpack.c.b16 %v119, %v117
    %152 = vmatprep.subr.bf16.mxu0 %v121
    %153 = vmatpush1.bf16.msra.mxu0 %v120
    %154 = vmatprep.subr.bf16.mxu0 %v123
    %155 = vmatpush1.bf16.msra.mxu0 %v122
    %156 = vmatprep.subr.bf16.mxu0 %v125
    %157 = vmatpush1.bf16.msra.mxu0 %v124
    %158 = vmatprep.subr.bf16.mxu0 %v127
    %159 = vmatpush1.bf16.msra.mxu0 %v126
    %160 = vmatprep.subr.bf16.mxu0 %v129
    %161 = vmatpush1.bf16.msra.mxu0 %v128
    %162 = vmatprep.subr.bf16.mxu0 %v131
    %163 = vmatpush1.bf16.msra.mxu0 %v130
    %164 = vmatprep.subr.bf16.mxu0 %v133
    %165 = vmatpush1.bf16.msra.mxu0 %v132
    %166 = vmatprep.subr.bf16.mxu0 %v135
    %167 = vmatpush1.bf16.msra.mxu0 %v134
    %168 = vmatprep.subr.bf16.mxu0 0
    %169 = vmatpush1.bf16.msra.mxu0 0
    %170 = vmatprep.subr.bf16.mxu0 0
    %171 = vmatpush1.bf16.msra.mxu0 0
    %172 = vmatprep.subr.bf16.mxu0 0
    %173 = vmatpush1.bf16.msra.mxu0 0
    %174 = vmatprep.subr.bf16.mxu0 0
    %175 = vmatpush1.bf16.msra.mxu0 0
    %176 = vmatprep.subr.bf16.mxu0 0
    %177 = vmatpush1.bf16.msra.mxu0 0
    %178 = vmatprep.subr.bf16.mxu0 0
    %179 = vmatpush1.bf16.msra.mxu0 0
    %180 = vmatprep.subr.bf16.mxu0 0
    %181 = vmatpush1.bf16.msra.mxu0 0
    %182 = vmatprep.subr.bf16.mxu0 0
    %183 = vmatpush1.bf16.msra.mxu0 0
    %184 = vmatprep.mubr.bf16.mxu0 0
    %185 = vmatmul.mubr.bf16.gmra.mrb[0].mxu0 %v41
    %v186 = vpop.f32.mrb[0].mxu0
    %v187 = vadd.f32 %v65, %v186
    %v188 = vpop.f32.mrb[0].mxu0
    %v189 = vadd.f32 %v69, %v188
    %v190 = vpop.f32.mrb[0].mxu0
    %v191 = vadd.f32 %v65, %v190
    %v192 = vpop.f32.mrb[0].mxu0
    %v193 = vadd.f32 %v69, %v192
    %194 = vmatprep.mubr.bf16.mxu0 0
    %195 = vmatmul.mubr.bf16.gmra.mrb[0].mxu0 %v42
    %v196 = vpop.f32.mrb[0].mxu0
    %v197 = vadd.f32 %v65, %v196
    %v198 = vpop.f32.mrb[0].mxu0
    %v199 = vadd.f32 %v69, %v198
    %v200 = vpop.f32.mrb[0].mxu0
    %v201 = vadd.f32 %v65, %v200
    %v202 = vpop.f32.mrb[0].mxu0
    %v203 = vadd.f32 %v69, %v202
    %204 = vmatprep.mubr.bf16.mxu0 0
    %205 = vmatmul.mubr.bf16.gmra.mrb[0].mxu0 %v43
    %v206 = vpop.f32.mrb[0].mxu0
    %v207 = vadd.f32 %v65, %v206
    %v208 = vpop.f32.mrb[0].mxu0
    %v209 = vadd.f32 %v69, %v208
    %v210 = vpop.f32.mrb[0].mxu0
    %v211 = vpop.f32.mrb[0].mxu0
    %212 = vdwg.mxu0
    %v213 = vmax.f32 %v187, 0.0
    %v214 = vmax.f32 %v189, 0.0
    %v215 = vmax.f32 %v191, 0.0
    %v216 = vmax.f32 %v193, 0.0
    %v217 = vmax.f32 %v197, 0.0
    %v218 = vmax.f32 %v199, 0.0
    %v219 = vmax.f32 %v201, 0.0
    %v220 = vmax.f32 %v203, 0.0
    %v221 = vmax.f32 %v207, 0.0
    %v222 = vmax.f32 %v209, 0.0
    %v223 = vpack.c.bf16 %v215, %v213
    %v224 = vpack.c.bf16 %v216, %v214
    %v225 = vpack.c.bf16 %v219, %v217
    %v226 = vpack.c.bf16 %v220, %v218
    %v227 = vpack.c.bf16 %v221, %v221
    %v228 = vpack.c.bf16 %v222, %v222
    %v229 = vld [vmem:[%s3] sm:$0xf]
    %v230 = vld [vmem:[%s3 + $0x4] sm:$0xf]
    %v231 = vld [vmem:[%s3 + $0x8] sm:$0xf]
    %v232 = vld [vmem:[%s3 + $0xc] sm:$0xf]
    %v233 = vld [vmem:[%s3 + $0x10] sm:$0xf]
    %v234 = vld [vmem:[%s3 + $0x14] sm:$0xf]
    %v235 = vld [vmem:[%s3 + $0x18] sm:$0xf]
    %v236 = vld [vmem:[%s3 + $0x1c] sm:$0xf]
    %v237 = vld [vmem:[%s3 + $0x20] sm:$0xf]
    %v238 = vld [vmem:[%s3 + $0x24] sm:$0xf]
    %v239 = vld [vmem:[%s3 + $0x28] sm:$0xf]
    %v240 = vld [vmem:[%s3 + $0x2c] sm:$0xf]
    %v241 = vld [vmem:[%s3 + $0x30] sm:$0xf]
    %v242 = vld [vmem:[%s3 + $0x34] sm:$0xf]
    %v243 = vld [vmem:[%s3 + $0x38] sm:$0xf]
    %v244 = vld [vmem:[%s3 + $0x3c] sm:$0xf]
    %v245 = vld [vmem:[%s3 + $0x40] sm:$0xf]
    %v246 = vld [vmem:[%s3 + $0x44] sm:$0xf]
    %v247 = vld [vmem:[%s3 + $0x48] sm:$0xf]
    %v248 = vld [vmem:[%s3 + $0x4c] sm:$0xf]
    %v249 = vld [vmem:[%s3 + $0x50] sm:$0xf]
    %v250 = vld [vmem:[%s3 + $0x54] sm:$0xf]
    %v251 = vld [vmem:[%s3 + $0x58] sm:$0xf]
    %v252 = vld [vmem:[%s3 + $0x5c] sm:$0xf]
    %v253 = vld [vmem:[%s3 + $0x60] sm:$0xf]
    %v254 = vld [vmem:[%s3 + $0x64] sm:$0xf]
    %v255 = vld [vmem:[%s3 + $0x68] sm:$0xf]
    %v256 = vld [vmem:[%s3 + $0x6c] sm:$0xf]
    %v257 = vld [vmem:[%s3 + $0x70] sm:$0xf]
    %v258 = vld [vmem:[%s3 + $0x74] sm:$0xf]
    %v259 = vld [vmem:[%s3 + $0x78] sm:$0xf]
    %v260 = vld [vmem:[%s3 + $0x7c] sm:$0xf]
    %s261 = sld [smem:[#allocation2]]
    %v262 = vstv %s261
    %v295 = vunpack.c.l.b16 %v229
    %v296 = vunpack.c.l.b16 %v230
    %v297 = vunpack.c.l.b16 %v231
    %v298 = vunpack.c.l.b16 %v232
    %v299 = vunpack.c.l.b16 %v233
    %v300 = vunpack.c.l.b16 %v234
    %v301 = vunpack.c.l.b16 %v235
    %v302 = vunpack.c.l.b16 %v236
    %v303 = vunpack.c.l.b16 %v237
    %v304 = vunpack.c.l.b16 %v238
    %v305 = vunpack.c.l.b16 %v239
    %v306 = vunpack.c.l.b16 %v240
    %v307 = vunpack.c.l.b16 %v241
    %v308 = vunpack.c.l.b16 %v242
    %v309 = vunpack.c.l.b16 %v243
    %v310 = vunpack.c.l.b16 %v244
    %v311 = vunpack.c.l.b16 %v245
    %v312 = vunpack.c.l.b16 %v246
    %v313 = vunpack.c.l.b16 %v247
    %v314 = vunpack.c.l.b16 %v248
    %v315 = vunpack.c.l.b16 %v249
    %v316 = vunpack.c.l.b16 %v250
    %v317 = vunpack.c.l.b16 %v251
    %v318 = vunpack.c.l.b16 %v252
    %v319 = vunpack.c.l.b16 %v253
    %v320 = vunpack.c.l.b16 %v254
    %v321 = vunpack.c.l.b16 %v255
    %v322 = vunpack.c.l.b16 %v256
    %v323 = vunpack.c.l.b16 %v257
    %v324 = vunpack.c.l.b16 %v258
    %v325 = vunpack.c.l.b16 %v259
    %v326 = vunpack.c.l.b16 %v260
    %v327 = vpack.c.b16 %v296, %v295
    %v328 = vpack.c.b16 %v298, %v297
    %v329 = vpack.c.b16 %v300, %v299
    %v330 = vpack.c.b16 %v302, %v301
    %v331 = vpack.c.b16 %v304, %v303
    %v332 = vpack.c.b16 %v306, %v305
    %v333 = vpack.c.b16 %v308, %v307
    %v334 = vpack.c.b16 %v310, %v309
    %v335 = vpack.c.b16 %v312, %v311
    %v336 = vpack.c.b16 %v314, %v313
    %v337 = vpack.c.b16 %v316, %v315
    %v338 = vpack.c.b16 %v318, %v317
    %v339 = vpack.c.b16 %v320, %v319
    %v340 = vpack.c.b16 %v322, %v321
    %v341 = vpack.c.b16 %v324, %v323
    %v342 = vpack.c.b16 %v326, %v325
    %359 = vmatprep.subr.bf16.mxu0 0
    %360 = vmatpush1.bf16.msra.mxu0 %v327
    %361 = vmatprep.subr.bf16.mxu0 0
    %362 = vmatpush1.bf16.msra.mxu0 %v328
    %363 = vmatprep.subr.bf16.mxu0 0
    %364 = vmatpush1.bf16.msra.mxu0 %v329
    %365 = vmatprep.subr.bf16.mxu0 0
    %366 = vmatpush1.bf16.msra.mxu0 %v330
    %367 = vmatprep.subr.bf16.mxu0 0
    %368 = vmatpush1.bf16.msra.mxu0 %v331
    %369 = vmatprep.subr.bf16.mxu0 0
    %370 = vmatpush1.bf16.msra.mxu0 %v332
    %371 = vmatprep.subr.bf16.mxu0 0
    %372 = vmatpush1.bf16.msra.mxu0 %v333
    %373 = vmatprep.subr.bf16.mxu0 0
    %374 = vmatpush1.bf16.msra.mxu0 %v334
    %375 = vmatprep.subr.bf16.mxu0 0
    %376 = vmatpush1.bf16.msra.mxu0 %v335
    %377 = vmatprep.subr.bf16.mxu0 0
    %378 = vmatpush1.bf16.msra.mxu0 %v336
    %379 = vmatprep.subr.bf16.mxu0 0
    %380 = vmatpush1.bf16.msra.mxu0 %v337
    %381 = vmatprep.subr.bf16.mxu0 0
    %382 = vmatpush1.bf16.msra.mxu0 %v338
    %383 = vmatprep.subr.bf16.mxu0 0
    %384 = vmatpush1.bf16.msra.mxu0 %v339
    %385 = vmatprep.subr.bf16.mxu0 0
    %386 = vmatpush1.bf16.msra.mxu0 %v340
    %387 = vmatprep.subr.bf16.mxu0 0
    %388 = vmatpush1.bf16.msra.mxu0 %v341
    %389 = vmatprep.subr.bf16.mxu0 0
    %390 = vmatpush1.bf16.msra.mxu0 %v342
    %391 = vmatprep.mubr.bf16.mxu0 %v224
    %392 = vmatmul.mubr.bf16.gmra.mrb[0].mxu0 %v223
    %v393 = vpop.f32.mrb[0].mxu0
    %v394 = vadd.f32 %v262, %v393
    %v395 = vpop.f32.mrb[0].mxu0
    %v396 = vpop.f32.mrb[0].mxu0
    %v397 = vadd.f32 %v262, %v396
    %v398 = vpop.f32.mrb[0].mxu0
    %399 = vmatprep.mubr.bf16.mxu0 %v226
    %400 = vmatmul.mubr.bf16.gmra.mrb[0].mxu0 %v225
    %v401 = vpop.f32.mrb[0].mxu0
    %v402 = vadd.f32 %v262, %v401
    %v403 = vpop.f32.mrb[0].mxu0
    %v404 = vpop.f32.mrb[0].mxu0
    %v405 = vadd.f32 %v262, %v404
    %v406 = vpop.f32.mrb[0].mxu0
    %407 = vmatprep.mubr.bf16.mxu0 %v228
    %408 = vmatmul.mubr.bf16.gmra.mrb[0].mxu0 %v227
    %v409 = vpop.f32.mrb[0].mxu0
    %v410 = vadd.f32 %v262, %v409
    %v411 = vpop.f32.mrb[0].mxu0
    %v412 = vpop.f32.mrb[0].mxu0
    %v413 = vpop.f32.mrb[0].mxu0
    %414 = vdwg.mxu0
    %vm415 = vcmask 64512
    %416 = vst.msk [vmem:[%s5] sm:$0xff] %vm415, %v394
    %417 = vst.msk [vmem:[%s5 + $0x8] sm:$0xff] %vm415, %v397
    %418 = vst.msk [vmem:[%s5 + $0x10] sm:$0xff] %vm415, %v402
    %419 = vst.msk [vmem:[%s5 + $0x18] sm:$0xff] %vm415, %v405
    %420 = vst.msk [vmem:[%s5 + $0x20] sm:$0xff] %vm415, %v410
    // Predicated region
    $region26: #{tpu_custom_call.1} parent=1 // pred_check
      _
    $region27: #{tpu_custom_call.1} parent=1 // pred_check_branch
      %422 = sbr.rel (0) target = $region29
    $region28: #{tpu_custom_call.1} parent=1 // pred_region
      _
    $region29: #{tpu_custom_call.1} parent=1 // pred_fallthru
      _
    // Predicated region
    $region30: #{tpu_custom_call.1} parent=1 // pred_check
      _
    $region31: #{tpu_custom_call.1} parent=1 // pred_check_branch
      %424 = sbr.rel (0) target = $region33
    $region32: #{tpu_custom_call.1} parent=1 // pred_region
      _
    $region33: #{tpu_custom_call.1} parent=1 // pred_fallthru
      _
    %425 = vsyncpa [#allocation4], 1

</llo_original>
